<compile_context>
chip_gen: v6e
topology: v6e:2x2x1
jax: 0.10.0
libtpu: 0.0.40
codegen_flags: <defaults>
</compile_context>

<pallas_src>
import functools

import jax
import jax.numpy as jnp
import numpy as np
from jax.experimental import pallas as pl
from jax.experimental.pallas import tpu as pltpu

LN_EPS = 1e-5       # torch nn.LayerNorm default eps
AGG_EPS = 1e-8      # epsilon used in aggregate_layer_attention


def _layer_norm(x, gamma, beta):
    mu = jnp.mean(x, axis=-1, keepdims=True)
    var = jnp.mean((x - mu) ** 2, axis=-1, keepdims=True)
    return (x - mu) * jax.lax.rsqrt(var + LN_EPS) * gamma + beta


def _lcsa_kernel(x_ref, vecs_ref, w_v_ref, w_out_ref, o_ref, la_ref,
                 *, embedding_dim, num_layers):
    D = embedding_dim * num_layers

    x = x_ref[...]                                  # (TB, D) f32
    vecs = vecs_ref[...]                            # (6, D)  f32
    pre_g, pre_b = vecs[0:1], vecs[1:2]
    in_b_v, out_b = vecs[2:3], vecs[3:4]
    post_g, post_b = vecs[4:5], vecs[5:6]

    # pre-norm
    xn = _layer_norm(x, pre_g, pre_b)               # (TB, D)

    # V projection only: seq_len == 1 -> softmax over a single key is 1 for
    # every head -> attention context == V.  Q/K thirds are never loaded.
    w_dt = w_v_ref.dtype
    v = jnp.dot(xn.astype(w_dt), w_v_ref[...],
                preferred_element_type=jnp.float32) + in_b_v      # (TB, D)

    # MHA out-projection
    attn_out = jnp.dot(v.astype(w_dt), w_out_ref[...],
                       preferred_element_type=jnp.float32) + out_b

    # residual (torch code adds the *pre-normed* x) + post-norm
    y = _layer_norm(attn_out + xn, post_g, post_b)  # (TB, D)
    o_ref[...] = y.astype(o_ref.dtype)

    # aggregate_layer_attention: per-layer chunk sums via one MXU matmul
    # against a constant-folded (D, num_layers) 0/1 mask, then per-row
    # min-shift, +eps, normalize.
    d_idx = jax.lax.broadcasted_iota(jnp.int32, (D, num_layers), 0)
    l_idx = jax.lax.broadcasted_iota(jnp.int32, (D, num_layers), 1)
    mask = ((d_idx >= l_idx * embedding_dim)
            & (d_idx < (l_idx + 1) * embedding_dim)).astype(jnp.float32)
    sums = jnp.dot(y, mask, preferred_element_type=jnp.float32)   # (TB, L)
    shifted = sums - jnp.min(sums, axis=-1, keepdims=True) + AGG_EPS
    la_ref[...] = shifted / jnp.sum(shifted, axis=-1, keepdims=True)


def _pick_row_block(B, max_tb=512):
    """Largest multiple of 8 that divides B (capped), else the whole batch."""
    if B < 8 or B % 8 != 0:
        return B
    tb = min(max_tb, B)
    tb -= tb % 8
    while tb >= 8:
        if B % tb == 0:
            return tb
        tb -= 8
    return 8


def layer_concat_self_attention(x, params, *, embedding_dim, num_layers,
                                num_heads, max_row_block=512,
                                weights_dtype=jnp.float32):
    """x: (B, D) float32 with D = embedding_dim * num_layers.

    Returns (attn_output (B, D), layer_attention (B, num_layers)).
    B == 1 reproduces the torch module exactly (eval mode)."""
    del num_heads  # head split has no effect when seq_len == 1 (softmax == 1)
    D = embedding_dim * num_layers
    B = x.shape[0]
    assert x.shape == (B, D), x.shape

    tb = _pick_row_block(B, max_tb=max_row_block)
    grid = (B // tb,)

    # Pack the small per-feature vectors into a single (6, D) input (one DMA).
    in_b_v = params["in_b"][:, 2 * D:3 * D]                        # V-slice bias
    vecs = jnp.concatenate(
        [params["pre_g"], params["pre_b"], in_b_v,
         params["out_b"], params["post_g"], params["post_b"]],
        axis=0).astype(jnp.float32)                                # (6, D)

    in_wT = params["in_wT"].astype(weights_dtype)                  # (D, 3D)
    out_wT = params["out_wT"].astype(weights_dtype)                # (D, D)

    # VMEM footprint guard (untiled-weights design).  If this trips at large D,
    # a K-axis grid with accumulator scratch is required instead.
    w_item = jnp.dtype(weights_dtype).itemsize
    vmem_est = 2 * (2 * D * D * w_item        # V-slice of in_wT + out_wT
                    + 6 * D * 4               # packed vectors
                    + 2 * tb * D * 4          # x + o row blocks
                    + tb * num_layers * 4)    # layer-attention block
    assert vmem_est < 48 * 1024 * 1024, (
        "Untiled weights exceed safe VMEM (v7x has 64 MiB); add K-axis tiling.")
    vmem_limit = int(min(60 * 1024 * 1024, max(2 * vmem_est, 16 * 1024 * 1024)))

    kernel = functools.partial(
        _lcsa_kernel, embedding_dim=embedding_dim, num_layers=num_layers)

    attn_output, layer_attention = pl.pallas_call(
        kernel,
        out_shape=(
            jax.ShapeDtypeStruct((B, D), jnp.float32),
            jax.ShapeDtypeStruct((B, num_layers), jnp.float32),
        ),
        grid=grid,
        in_specs=[
            pl.BlockSpec((tb, D), lambda i: (i, 0)),      # x row block
            pl.BlockSpec((6, D), lambda i: (0, 0)),       # packed param vectors
            pl.BlockSpec((D, D), lambda i: (0, 2)),       # V slice of in_wT only
            pl.BlockSpec((D, D), lambda i: (0, 0)),       # out_wT
        ],
        out_specs=(
            pl.BlockSpec((tb, D), lambda i: (i, 0)),
            pl.BlockSpec((tb, num_layers), lambda i: (i, 0)),
        ),
        compiler_params=pltpu.CompilerParams(
            dimension_semantics=("parallel",),
            vmem_limit_bytes=vmem_limit),
    )(x, vecs, in_wT, out_wT)
    return attn_output, layer_attention


def _reference(x, params, embedding_dim, num_layers):
    """Pure-JAX reference of the torch forward (eval mode), batched per row."""
    D = embedding_dim * num_layers
    xn = _layer_norm(x, params["pre_g"], params["pre_b"])
    qkv = xn @ params["in_wT"] + params["in_b"]
    v = qkv[:, 2 * D:]
    attn_out = v @ params["out_wT"] + params["out_b"]     # softmax over 1 key == 1
    y = _layer_norm(attn_out + xn, params["post_g"], params["post_b"])
    sums = y.reshape(-1, num_layers, embedding_dim).sum(axis=-1)   # (B, L)
    la = sums - sums.min(axis=-1, keepdims=True) + AGG_EPS
    la = la / la.sum(axis=-1, keepdims=True)
    return y, la


if __name__ == "__main__":
    embedding_dim, num_layers, num_heads = 32, 4, 4
    D = embedding_dim * num_layers  # 128
    B = 8                           # batch of tokens (B=1 == original module)

    key = jax.random.PRNGKey(0)
    kx, kw_in, kb_in, kw_out, kb_out = jax.random.split(key, 5)

    x = jax.random.normal(kx, (B, D), dtype=jnp.float32)

    # Deterministic synthetic parameters (shapes from nn.MultiheadAttention /
    # nn.LayerNorm __init__).  Weights passed pre-transposed as (in, out).
    in_proj_w = jax.random.normal(kw_in, (3 * D, D), dtype=jnp.float32) * 0.05
    in_proj_b = jax.random.normal(kb_in, (3 * D,), dtype=jnp.float32) * 0.05
    out_proj_w = jax.random.normal(kw_out, (D, D), dtype=jnp.float32) * 0.05
    out_proj_b = jax.random.normal(kb_out, (D,), dtype=jnp.float32) * 0.05

    params = {
        "pre_g": jnp.ones((1, D), jnp.float32),
        "pre_b": jnp.zeros((1, D), jnp.float32),
        "in_wT": in_proj_w.T,                      # (D, 3D)
        "in_b": in_proj_b.reshape(1, 3 * D),
        "out_wT": out_proj_w.T,                    # (D, D)
        "out_b": out_proj_b.reshape(1, D),
        "post_g": jnp.ones((1, D), jnp.float32),
        "post_b": jnp.zeros((1, D), jnp.float32),
    }

    attn_output, layer_attention = layer_concat_self_attention(
        x, params, embedding_dim=embedding_dim,
        num_layers=num_layers, num_heads=num_heads)
    jax.block_until_ready((attn_output, layer_attention))

    ref_out, ref_la = _reference(x, params, embedding_dim, num_layers)
    np.testing.assert_allclose(np.asarray(attn_output), np.asarray(ref_out),
                               rtol=1e-5, atol=1e-5)
    np.testing.assert_allclose(np.asarray(layer_attention), np.asarray(ref_la),
                               rtol=1e-5, atol=1e-6)

    print("KERNEL_OK")
</pallas_src>

<mosaic_0001>
module attributes {stable_mosaic.version = 11 : i64} {
  func.func @_lcsa_kernel(%arg0: i32, %arg1: memref<8x128xf32, #tpu.memory_space<vmem>>, %arg2: memref<6x128xf32, #tpu.memory_space<vmem>>, %arg3: memref<128x128xf32, #tpu.memory_space<vmem>>, %arg4: memref<128x128xf32, #tpu.memory_space<vmem>>, %arg5: memref<8x128xf32, #tpu.memory_space<vmem>>, %arg6: memref<8x4xf32, #tpu.memory_space<vmem>>) attributes {dimension_semantics = [#tpu.dimension_semantics<parallel>], iteration_bounds = array<i64: 1>, scalar_prefetch = 0 : i64, scratch_operands = 0 : i64, tpu.core_type = #tpu.core_type<tc>, window_params = [{transform_indices = @transform_0, window_bounds = array<i64: 8, 128>}, {pipeline_mode = #tpu.pipeline_mode<synchronous>, transform_indices = @transform_1, window_bounds = array<i64: 6, 128>}, {transform_indices = @transform_2, window_bounds = array<i64: 128, 128>}, {pipeline_mode = #tpu.pipeline_mode<synchronous>, transform_indices = @transform_3, window_bounds = array<i64: 128, 128>}, {transform_indices = @transform_4, window_bounds = array<i64: 8, 128>}, {transform_indices = @transform_5, window_bounds = array<i64: 8, 4>}]} {
    %c0 = arith.constant 0 : index
    %c0_0 = arith.constant 0 : index
    %0 = vector.load %arg1[%c0, %c0_0] : memref<8x128xf32, #tpu.memory_space<vmem>>, vector<8x128xf32>
    %c0_1 = arith.constant 0 : index
    %c0_2 = arith.constant 0 : index
    %1 = vector.load %arg2[%c0_1, %c0_2] : memref<6x128xf32, #tpu.memory_space<vmem>>, vector<6x128xf32>
    %2 = vector.extract_strided_slice %1 {offsets = [0, 0], sizes = [1, 128], strides = [1, 1]} : vector<6x128xf32> to vector<1x128xf32>
    %3 = vector.extract_strided_slice %1 {offsets = [1, 0], sizes = [1, 128], strides = [1, 1]} : vector<6x128xf32> to vector<1x128xf32>
    %4 = vector.extract_strided_slice %1 {offsets = [2, 0], sizes = [1, 128], strides = [1, 1]} : vector<6x128xf32> to vector<1x128xf32>
    %5 = vector.extract_strided_slice %1 {offsets = [3, 0], sizes = [1, 128], strides = [1, 1]} : vector<6x128xf32> to vector<1x128xf32>
    %6 = vector.extract_strided_slice %1 {offsets = [4, 0], sizes = [1, 128], strides = [1, 1]} : vector<6x128xf32> to vector<1x128xf32>
    %7 = vector.extract_strided_slice %1 {offsets = [5, 0], sizes = [1, 128], strides = [1, 1]} : vector<6x128xf32> to vector<1x128xf32>
    %cst = arith.constant dense<0.000000e+00> : vector<8xf32>
    %8 = vector.multi_reduction <add>, %0, %cst [1] : vector<8x128xf32> to vector<8xf32>
    %9 = vector.shape_cast %8 : vector<8xf32> to vector<8x1xf32>
    %cst_3 = arith.constant 1.280000e+02 : f32
    %10 = vector.broadcast %cst_3 : f32 to vector<8x1xf32>
    %11 = arith.divf %9, %10 : vector<8x1xf32>
    %12 = vector.broadcast %11 : vector<8x1xf32> to vector<8x128xf32>
    %13 = arith.subf %0, %12 : vector<8x128xf32>
    %14 = arith.mulf %13, %13 : vector<8x128xf32>
    %cst_4 = arith.constant dense<0.000000e+00> : vector<8xf32>
    %15 = vector.multi_reduction <add>, %14, %cst_4 [1] : vector<8x128xf32> to vector<8xf32>
    %16 = vector.shape_cast %15 : vector<8xf32> to vector<8x1xf32>
    %cst_5 = arith.constant 1.280000e+02 : f32
    %17 = vector.broadcast %cst_5 : f32 to vector<8x1xf32>
    %18 = arith.divf %16, %17 : vector<8x1xf32>
    %19 = vector.broadcast %11 : vector<8x1xf32> to vector<8x128xf32>
    %20 = arith.subf %0, %19 : vector<8x128xf32>
    %cst_6 = arith.constant 9.99999974E-6 : f32
    %21 = vector.broadcast %cst_6 : f32 to vector<8x1xf32>
    %22 = arith.addf %18, %21 : vector<8x1xf32>
    %23 = math.rsqrt %22 : vector<8x1xf32>
    %24 = vector.broadcast %23 : vector<8x1xf32> to vector<8x128xf32>
    %25 = arith.mulf %20, %24 : vector<8x128xf32>
    %26 = vector.broadcast %2 : vector<1x128xf32> to vector<8x128xf32>
    %27 = arith.mulf %25, %26 : vector<8x128xf32>
    %28 = vector.broadcast %3 : vector<1x128xf32> to vector<8x128xf32>
    %29 = arith.addf %27, %28 : vector<8x128xf32>
    %c0_7 = arith.constant 0 : index
    %c0_8 = arith.constant 0 : index
    %30 = vector.load %arg3[%c0_7, %c0_8] : memref<128x128xf32, #tpu.memory_space<vmem>>, vector<128x128xf32>
    %cst_9 = arith.constant dense<0.000000e+00> : vector<8x128xf32>
    %31 = tpu.matmul %29, %30, %cst_9 {dimension_numbers = #tpu.dot_dimension_numbers<[1], [0], [0], [1], [0, 0, 1, 1], [], []>} : vector<8x128xf32>, vector<128x128xf32>, vector<8x128xf32> -> vector<8x128xf32>
    %32 = vector.broadcast %4 : vector<1x128xf32> to vector<8x128xf32>
    %33 = arith.addf %31, %32 : vector<8x128xf32>
    %c0_10 = arith.constant 0 : index
    %c0_11 = arith.constant 0 : index
    %34 = vector.load %arg4[%c0_10, %c0_11] : memref<128x128xf32, #tpu.memory_space<vmem>>, vector<128x128xf32>
    %cst_12 = arith.constant dense<0.000000e+00> : vector<8x128xf32>
    %35 = tpu.matmul %33, %34, %cst_12 {dimension_numbers = #tpu.dot_dimension_numbers<[1], [0], [0], [1], [0, 0, 1, 1], [], []>} : vector<8x128xf32>, vector<128x128xf32>, vector<8x128xf32> -> vector<8x128xf32>
    %36 = vector.broadcast %5 : vector<1x128xf32> to vector<8x128xf32>
    %37 = arith.addf %35, %36 : vector<8x128xf32>
    %38 = arith.addf %37, %29 : vector<8x128xf32>
    %cst_13 = arith.constant dense<0.000000e+00> : vector<8xf32>
    %39 = vector.multi_reduction <add>, %38, %cst_13 [1] : vector<8x128xf32> to vector<8xf32>
    %40 = vector.shape_cast %39 : vector<8xf32> to vector<8x1xf32>
    %cst_14 = arith.constant 1.280000e+02 : f32
    %41 = vector.broadcast %cst_14 : f32 to vector<8x1xf32>
    %42 = arith.divf %40, %41 : vector<8x1xf32>
    %43 = vector.broadcast %42 : vector<8x1xf32> to vector<8x128xf32>
    %44 = arith.subf %38, %43 : vector<8x128xf32>
    %45 = arith.mulf %44, %44 : vector<8x128xf32>
    %cst_15 = arith.constant dense<0.000000e+00> : vector<8xf32>
    %46 = vector.multi_reduction <add>, %45, %cst_15 [1] : vector<8x128xf32> to vector<8xf32>
    %47 = vector.shape_cast %46 : vector<8xf32> to vector<8x1xf32>
    %cst_16 = arith.constant 1.280000e+02 : f32
    %48 = vector.broadcast %cst_16 : f32 to vector<8x1xf32>
    %49 = arith.divf %47, %48 : vector<8x1xf32>
    %50 = vector.broadcast %42 : vector<8x1xf32> to vector<8x128xf32>
    %51 = arith.subf %38, %50 : vector<8x128xf32>
    %cst_17 = arith.constant 9.99999974E-6 : f32
    %52 = vector.broadcast %cst_17 : f32 to vector<8x1xf32>
    %53 = arith.addf %49, %52 : vector<8x1xf32>
    %54 = math.rsqrt %53 : vector<8x1xf32>
    %55 = vector.broadcast %54 : vector<8x1xf32> to vector<8x128xf32>
    %56 = arith.mulf %51, %55 : vector<8x128xf32>
    %57 = vector.broadcast %6 : vector<1x128xf32> to vector<8x128xf32>
    %58 = arith.mulf %56, %57 : vector<8x128xf32>
    %59 = vector.broadcast %7 : vector<1x128xf32> to vector<8x128xf32>
    %60 = arith.addf %58, %59 : vector<8x128xf32>
    %c0_18 = arith.constant 0 : index
    %c0_19 = arith.constant 0 : index
    %61 = vector.load %arg5[%c0_18, %c0_19] : memref<8x128xf32, #tpu.memory_space<vmem>>, vector<8x128xf32>
    tpu.vector_store %arg5[%c0_18, %c0_19], %60 {strides = array<i32>} : memref<8x128xf32, #tpu.memory_space<vmem>>, vector<8x128xf32>,
    %62 = tpu.iota {dimensions = array<i32: 0>} : vector<128x4xi32>
    %63 = tpu.iota {dimensions = array<i32: 1>} : vector<128x4xi32>
    %c32_i32 = arith.constant 32 : i32
    %64 = vector.broadcast %c32_i32 : i32 to vector<128x4xi32>
    %65 = arith.muli %63, %64 : vector<128x4xi32>
    %66 = arith.cmpi sge, %62, %65 : vector<128x4xi32>
    %c1_i32 = arith.constant 1 : i32
    %67 = vector.broadcast %c1_i32 : i32 to vector<128x4xi32>
    %68 = arith.addi %63, %67 : vector<128x4xi32>
    %c32_i32_20 = arith.constant 32 : i32
    %69 = vector.broadcast %c32_i32_20 : i32 to vector<128x4xi32>
    %70 = arith.muli %68, %69 : vector<128x4xi32>
    %71 = arith.cmpi slt, %62, %70 : vector<128x4xi32>
    %72 = arith.andi %66, %71 : vector<128x4xi1>
    %73 = arith.extui %72 : vector<128x4xi1> to vector<128x4xi32>
    %74 = arith.sitofp %73 : vector<128x4xi32> to vector<128x4xf32>
    %cst_21 = arith.constant dense<0.000000e+00> : vector<8x4xf32>
    %75 = tpu.matmul %60, %74, %cst_21 {dimension_numbers = #tpu.dot_dimension_numbers<[1], [0], [0], [1], [0, 0, 1, 1], [], []>} : vector<8x128xf32>, vector<128x4xf32>, vector<8x4xf32> -> vector<8x4xf32>
    %cst_22 = arith.constant dense<0x7F800000> : vector<8xf32>
    %76 = vector.multi_reduction <minimumf>, %75, %cst_22 [1] : vector<8x4xf32> to vector<8xf32>
    %77 = vector.shape_cast %76 : vector<8xf32> to vector<8x1xf32>
    %78 = vector.broadcast %77 : vector<8x1xf32> to vector<8x4xf32>
    %79 = arith.subf %75, %78 : vector<8x4xf32>
    %cst_23 = arith.constant 9.99999993E-9 : f32
    %80 = vector.broadcast %cst_23 : f32 to vector<8x4xf32>
    %81 = arith.addf %79, %80 : vector<8x4xf32>
    %cst_24 = arith.constant dense<0.000000e+00> : vector<8xf32>
    %82 = vector.multi_reduction <add>, %81, %cst_24 [1] : vector<8x4xf32> to vector<8xf32>
    %83 = vector.shape_cast %82 : vector<8xf32> to vector<8x1xf32>
    %84 = vector.broadcast %83 : vector<8x1xf32> to vector<8x4xf32>
    %85 = arith.divf %81, %84 : vector<8x4xf32>
    %c0_25 = arith.constant 0 : index
    %c0_26 = arith.constant 0 : index
    %86 = vector.load %arg6[%c0_25, %c0_26] : memref<8x4xf32, #tpu.memory_space<vmem>>, vector<8x4xf32>
    tpu.vector_store %arg6[%c0_25, %c0_26], %85 {strides = array<i32>} : memref<8x4xf32, #tpu.memory_space<vmem>>, vector<8x4xf32>,
    return
  }
  func.func @transform_0(%arg0: i32) -> (i32, i32) {
    %c0_i32 = arith.constant 0 : i32
    %c0_i32_0 = arith.constant 0 : i32
    return %arg0, %c0_i32 : i32, i32
  }
  func.func @transform_1(%arg0: i32) -> (i32, i32) {
    %c0_i32 = arith.constant 0 : i32
    %c0_i32_0 = arith.constant 0 : i32
    %c0_i32_1 = arith.constant 0 : i32
    return %c0_i32, %c0_i32_0 : i32, i32
  }
  func.func @transform_2(%arg0: i32) -> (i32, i32) {
    %c0_i32 = arith.constant 0 : i32
    %c2_i32 = arith.constant 2 : i32
    %c0_i32_0 = arith.constant 0 : i32
    return %c0_i32, %c2_i32 : i32, i32
  }
  func.func @transform_3(%arg0: i32) -> (i32, i32) {
    %c0_i32 = arith.constant 0 : i32
    %c0_i32_0 = arith.constant 0 : i32
    %c0_i32_1 = arith.constant 0 : i32
    return %c0_i32, %c0_i32_0 : i32, i32
  }
  func.func @transform_4(%arg0: i32) -> (i32, i32) {
    %c0_i32 = arith.constant 0 : i32
    %c0_i32_0 = arith.constant 0 : i32
    return %arg0, %c0_i32 : i32, i32
  }
  func.func @transform_5(%arg0: i32) -> (i32, i32) {
    %c0_i32 = arith.constant 0 : i32
    %c0_i32_0 = arith.constant 0 : i32
    return %arg0, %c0_i32 : i32, i32
  }
}

</mosaic_0001>

<llo_original>
// kernel: tpu_custom_call.1
$region0: #{tpu_custom_call.1}
  #allocation0 [shape = 'u32[]', space=smem, size = 0x4, offset = 0x4, fixed_abs, tag = 'smem constant byte address 0x4 - core index']
  #allocation1 [shape = 'u32[144,128]{1,0:T(1,128)}', space=vmem, size = 0x12000, scoped, tag = 'internal scratch']
  %s0 = inlined_call_operand.hbm [shape: f32[8,128], index: 0, kind: input, shape index: {}]
  %s1 = inlined_call_operand.hbm [shape: f32[6,128], index: 1, kind: input, shape index: {}]
  %s2 = inlined_call_operand.hbm [shape: f32[128,384], index: 2, kind: input, shape index: {}]
  %s3 = inlined_call_operand.hbm [shape: f32[128,128], index: 3, kind: input, shape index: {}]
  %s4 = inlined_call_operand.hbm [shape: f32[8,128], index: 4, kind: output, shape index: {0}]
  %s5 = inlined_call_operand.vmem [shape: f32[8,4], index: 5, kind: output, shape index: {1}]
  %6 = xla_tuple %s4, %s5
  %s7 = sld [smem:[#allocation0]]
  $region50: #{tpu_custom_call.1} parent=0
    _
  %s9 = ssub.s32 1, %s7
  %s10 = scalar_select 0, %s9, %s7
  $region1: #{tpu_custom_call.1} parent=0
    #allocation2 [shape = 'u8[4096]{0}', space=vmem, size = 0x1000, scoped, tag = 'input window, operand 0, single buffered']
    #allocation3 [shape = 's32[1]{0}', space=sflag, size = 0x4, scoped, tag = 'scoped memory for tpu_custom_call.1']
    #allocation4 [shape = 's32[1]{0}', space=sflag, size = 0x4, scoped, tag = 'scoped memory for tpu_custom_call.1']
    #allocation5 [shape = 'u8[4096]{0}', space=vmem, size = 0x1000, scoped, tag = 'input window, operand 1, single buffered']
    #allocation6 [shape = 's32[1]{0}', space=sflag, size = 0x4, scoped, tag = 'scoped memory for tpu_custom_call.1']
    #allocation7 [shape = 'u8[65536]{0}', space=vmem, size = 0x10000, scoped, tag = 'input window, operand 2, single buffered']
    #allocation8 [shape = 'u8[65536]{0}', space=vmem, size = 0x10000, scoped, tag = 'input window, operand 3, single buffered']
    #allocation9 [shape = 's32[1]{0}', space=sflag, size = 0x4, scoped, tag = 'scoped memory for tpu_custom_call.1']
    #allocation10 [shape = 'u8[4096]{0}', space=vmem, size = 0x1000, scoped, tag = 'output window, operand 0, single buffered']
    %11 = vsyncpa [#allocation3], 0
    %12 = vsyncpa [#allocation6], 0
    %13 = vsyncpa [#allocation9], 0
    %14 = vsyncpa [#allocation4], 0
    // Predicated region
    $region2: #{tpu_custom_call.1} parent=1 // pred_check
      _
    $region3: #{tpu_custom_call.1} parent=1 // pred_check_branch
      %16 = sbr.rel (0) target = $region5
    $region4: #{tpu_custom_call.1} parent=1 // pred_region
      %s18 = ssub.s32 128, 128
      %19 = vsyncadd [#allocation3], %s18
      %s21 = sshll.u32 [#allocation2], 4
      %s22 = int_to_ptr.vmem [resolvable:$true] %s21
      %24 = dma.hbm_to_vmem [thread:$0]  %s0, 128, %s22, [#allocation3]
    $region5: #{tpu_custom_call.1} parent=1 // pred_fallthru
      _
    // Predicated region
    $region6: #{tpu_custom_call.1} parent=1 // pred_check
      _
    $region7: #{tpu_custom_call.1} parent=1 // pred_check_branch
      %26 = sbr.rel (0) target = $region9
    $region8: #{tpu_custom_call.1} parent=1 // pred_region
      %s28 = ssub.s32 128, 128
      %29 = vsyncadd [#allocation6], %s28
      %s31 = sshll.u32 [#allocation5], 4
      %s32 = int_to_ptr.vmem [resolvable:$true] %s31
      %34 = dma.hbm_to_vmem [thread:$0]  %s1, 128, %s32, [#allocation6]
    $region9: #{tpu_custom_call.1} parent=1 // pred_fallthru
      _
    // Predicated region
    $region10: #{tpu_custom_call.1} parent=1 // pred_check
      _
    $region11: #{tpu_custom_call.1} parent=1 // pred_check_branch
      %36 = sbr.rel (0) target = $region13
    $region12: #{tpu_custom_call.1} parent=1 // pred_region
      %s38 = ssub.s32 2048, 2048
      %39 = vsyncadd [#allocation6], %s38
      %s40 = scalar_lea.hbm %s2, 256
      %s41 = sshll.u32 [#allocation7], 4
      %s42 = int_to_ptr.vmem [resolvable:$true] %s41
      %47 = dma.hbm_to_vmem [thread:$0]  %s40, 2048, %s42, [#allocation6], 384, 128, 8
    $region13: #{tpu_custom_call.1} parent=1 // pred_fallthru
      _
    // Predicated region
    $region14: #{tpu_custom_call.1} parent=1 // pred_check
      _
    $region15: #{tpu_custom_call.1} parent=1 // pred_check_branch
      %49 = sbr.rel (0) target = $region17
    $region16: #{tpu_custom_call.1} parent=1 // pred_region
      %s51 = ssub.s32 2048, 2048
      %52 = vsyncadd [#allocation9], %s51
      %s53 = sshll.u32 [#allocation8], 4
      %s54 = int_to_ptr.vmem [resolvable:$true] %s53
      %59 = dma.hbm_to_vmem [thread:$0]  %s3, 2048, %s54, [#allocation9], 128, 128, 8
    $region17: #{tpu_custom_call.1} parent=1 // pred_fallthru
      _
    // Predicated region
    $region18: #{tpu_custom_call.1} parent=1 // pred_check
      _
    $region19: #{tpu_custom_call.1} parent=1 // pred_check_branch
      %61 = sbr.rel (0) target = $region21
    $region20: #{tpu_custom_call.1} parent=1 // pred_region
      %62 = dma.done [#allocation3], 128
    $region21: #{tpu_custom_call.1} parent=1 // pred_fallthru
      _
    // Predicated region
    $region22: #{tpu_custom_call.1} parent=1 // pred_check
      _
    $region23: #{tpu_custom_call.1} parent=1 // pred_check_branch
      %64 = sbr.rel (0) target = $region25
    $region24: #{tpu_custom_call.1} parent=1 // pred_region
      %65 = dma.done [#allocation6], 128
    $region25: #{tpu_custom_call.1} parent=1 // pred_fallthru
      _
    // Predicated region
    $region26: #{tpu_custom_call.1} parent=1 // pred_check
      _
    $region27: #{tpu_custom_call.1} parent=1 // pred_check_branch
      %67 = sbr.rel (0) target = $region29
    $region28: #{tpu_custom_call.1} parent=1 // pred_region
      %68 = dma.done [#allocation6], 2048
    $region29: #{tpu_custom_call.1} parent=1 // pred_fallthru
      _
    // Predicated region
    $region30: #{tpu_custom_call.1} parent=1 // pred_check
      _
    $region31: #{tpu_custom_call.1} parent=1 // pred_check_branch
      %70 = sbr.rel (0) target = $region33
    $region32: #{tpu_custom_call.1} parent=1 // pred_region
      %71 = dma.done [#allocation9], 2048
    $region33: #{tpu_custom_call.1} parent=1 // pred_fallthru
      _
    %v72 = vld [vmem:[#allocation2] sm:$0xff]
    %v73 = vld [vmem:[#allocation5] sm:$0x3f]
    %74 = vadd.xlane.f32.xlu0 %v72
    %v75 = vpop.xlane.xlu0 %74
    %v76 = vrcp.pop 128.0
    %v77 = vmul.f32 %v75, %v76
    %v78 = vsub.f32 %v72, %v77
    %v79 = vmul.f32 %v78, %v78
    %80 = vadd.xlane.f32.xlu0 %v79
    %v81 = vpop.xlane.xlu0 %80
    %v82 = vmul.f32 %v81, %v76
    %v83 = vadd.f32 %v82, 1e-05
    %v84 = vrsqrt.pop %v83
    %v85 = vmul.f32 %v78, %v84
    %v86 = vlaneseq
    %v87 = vshrl.u32 %v86, 7
    %v88 = vsub.s32 0, %v87
    %v89 = vrot.slane %v73, %v88
    %v90 = vmul.f32 %v85, %v89
    %v91 = vlaneseq
    %v92 = vshrl.u32 %v91, 7
    %v93 = vsub.s32 1, %v92
    %v94 = vrot.slane %v73, %v93
    %v95 = vadd.f32 %v90, %v94
    %v96 = vld [vmem:[#allocation7] sm:$0xff]
    %v97 = vld [vmem:[#allocation7 + $0x8] sm:$0xff]
    %v98 = vld [vmem:[#allocation7 + $0x10] sm:$0xff]
    %v99 = vld [vmem:[#allocation7 + $0x18] sm:$0xff]
    %v100 = vld [vmem:[#allocation7 + $0x20] sm:$0xff]
    %v101 = vld [vmem:[#allocation7 + $0x28] sm:$0xff]
    %v102 = vld [vmem:[#allocation7 + $0x30] sm:$0xff]
    %v103 = vld [vmem:[#allocation7 + $0x38] sm:$0xff]
    %v104 = vld [vmem:[#allocation7 + $0x40] sm:$0xff]
    %v105 = vld [vmem:[#allocation7 + $0x48] sm:$0xff]
    %v106 = vld [vmem:[#allocation7 + $0x50] sm:$0xff]
    %v107 = vld [vmem:[#allocation7 + $0x58] sm:$0xff]
    %v108 = vld [vmem:[#allocation7 + $0x60] sm:$0xff]
    %v109 = vld [vmem:[#allocation7 + $0x68] sm:$0xff]
    %v110 = vld [vmem:[#allocation7 + $0x70] sm:$0xff]
    %v111 = vld [vmem:[#allocation7 + $0x78] sm:$0xff]
    %v112 = vlaneseq
    %v113 = vshrl.u32 %v112, 7
    %v114 = vsub.s32 2, %v113
    %v115 = vrot.slane %v73, %v114
    %116 = vmatprep.subr.mxu0 0.0
    %117 = vmatpush1.msra.mxu0 %v111
    %118 = vmatprep.subr.mxu0 0.0
    %119 = vmatpush1.msra.mxu0 %v110
    %120 = vmatprep.subr.mxu0 0.0
    %121 = vmatpush1.msra.mxu0 %v109
    %122 = vmatprep.subr.mxu0 0.0
    %123 = vmatpush1.msra.mxu0 %v108
    %124 = vmatprep.subr.mxu0 0.0
    %125 = vmatpush1.msra.mxu0 %v107
    %126 = vmatprep.subr.mxu0 0.0
    %127 = vmatpush1.msra.mxu0 %v106
    %128 = vmatprep.subr.mxu0 0.0
    %129 = vmatpush1.msra.mxu0 %v105
    %130 = vmatprep.subr.mxu0 0.0
    %131 = vmatpush1.msra.mxu0 %v104
    %132 = vmatprep.subr.mxu0 0.0
    %133 = vmatpush1.msra.mxu0 %v103
    %134 = vmatprep.subr.mxu0 0.0
    %135 = vmatpush1.msra.mxu0 %v102
    %136 = vmatprep.subr.mxu0 0.0
    %137 = vmatpush1.msra.mxu0 %v101
    %138 = vmatprep.subr.mxu0 0.0
    %139 = vmatpush1.msra.mxu0 %v100
    %140 = vmatprep.subr.mxu0 0.0
    %141 = vmatpush1.msra.mxu0 %v99
    %142 = vmatprep.subr.mxu0 0.0
    %143 = vmatpush1.msra.mxu0 %v98
    %144 = vmatprep.subr.mxu0 0.0
    %145 = vmatpush1.msra.mxu0 %v97
    %146 = vmatprep.subr.mxu0 0.0
    %147 = vmatpush1.msra.mxu0 %v96
    %148 = vmatprep.subr.mxu0 0.0
    %149 = vmatpush2.msra.mxu0 0.0
    %150 = vmatprep.subr.mxu0 0.0
    %151 = vmatpush2.msra.mxu0 0.0
    %152 = vmatprep.subr.mxu0 0.0
    %153 = vmatpush2.msra.mxu0 0.0
    %154 = vmatprep.subr.mxu0 0.0
    %155 = vmatpush2.msra.mxu0 0.0
    %156 = vmatprep.subr.mxu0 0.0
    %157 = vmatpush2.msra.mxu0 0.0
    %158 = vmatprep.subr.mxu0 0.0
    %159 = vmatpush2.msra.mxu0 0.0
    %160 = vmatprep.subr.mxu0 0.0
    %161 = vmatpush2.msra.mxu0 0.0
    %162 = vmatprep.subr.mxu0 0.0
    %163 = vmatpush2.msra.mxu0 0.0
    %164 = vmatprep.subr.mxu0 0.0
    %165 = vmatpush2.msra.mxu0 0.0
    %166 = vmatprep.subr.mxu0 0.0
    %167 = vmatpush2.msra.mxu0 0.0
    %168 = vmatprep.subr.mxu0 0.0
    %169 = vmatpush2.msra.mxu0 0.0
    %170 = vmatprep.subr.mxu0 0.0
    %171 = vmatpush2.msra.mxu0 0.0
    %172 = vmatprep.subr.mxu0 0.0
    %173 = vmatpush2.msra.mxu0 0.0
    %174 = vmatprep.subr.mxu0 0.0
    %175 = vmatpush2.msra.mxu0 0.0
    %176 = vmatprep.subr.mxu0 0.0
    %177 = vmatpush2.msra.mxu0 0.0
    %178 = vmatprep.subr.mxu0 0.0
    %179 = vmatpush2.msra.mxu0 0.0
    %180 = vmatprep.mubr.f32.mxu0 0.0
    %181 = vmatmul.mubr.f32.gmra.mxu0 %v95
    %v182 = vpop.f32.mrf.mxu0
    %v183 = vadd.f32 %v115, %v182
    %v184 = vpop.f32.mrf.mxu0
    %185 = vdwg.mxu0
    %v186 = vld [vmem:[#allocation8] sm:$0xff]
    %v187 = vld [vmem:[#allocation8 + $0x8] sm:$0xff]
    %v188 = vld [vmem:[#allocation8 + $0x10] sm:$0xff]
    %v189 = vld [vmem:[#allocation8 + $0x18] sm:$0xff]
    %v190 = vld [vmem:[#allocation8 + $0x20] sm:$0xff]
    %v191 = vld [vmem:[#allocation8 + $0x28] sm:$0xff]
    %v192 = vld [vmem:[#allocation8 + $0x30] sm:$0xff]
    %v193 = vld [vmem:[#allocation8 + $0x38] sm:$0xff]
    %v194 = vld [vmem:[#allocation8 + $0x40] sm:$0xff]
    %v195 = vld [vmem:[#allocation8 + $0x48] sm:$0xff]
    %v196 = vld [vmem:[#allocation8 + $0x50] sm:$0xff]
    %v197 = vld [vmem:[#allocation8 + $0x58] sm:$0xff]
    %v198 = vld [vmem:[#allocation8 + $0x60] sm:$0xff]
    %v199 = vld [vmem:[#allocation8 + $0x68] sm:$0xff]
    %v200 = vld [vmem:[#allocation8 + $0x70] sm:$0xff]
    %v201 = vld [vmem:[#allocation8 + $0x78] sm:$0xff]
    %v202 = vlaneseq
    %v203 = vshrl.u32 %v202, 7
    %v204 = vsub.s32 3, %v203
    %v205 = vrot.slane %v73, %v204
    %206 = vmatprep.subr.mxu0 0.0
    %207 = vmatpush1.msra.mxu0 %v201
    %208 = vmatprep.subr.mxu0 0.0
    %209 = vmatpush1.msra.mxu0 %v200
    %210 = vmatprep.subr.mxu0 0.0
    %211 = vmatpush1.msra.mxu0 %v199
    %212 = vmatprep.subr.mxu0 0.0
    %213 = vmatpush1.msra.mxu0 %v198
    %214 = vmatprep.subr.mxu0 0.0
    %215 = vmatpush1.msra.mxu0 %v197
    %216 = vmatprep.subr.mxu0 0.0
    %217 = vmatpush1.msra.mxu0 %v196
    %218 = vmatprep.subr.mxu0 0.0
    %219 = vmatpush1.msra.mxu0 %v195
    %220 = vmatprep.subr.mxu0 0.0
    %221 = vmatpush1.msra.mxu0 %v194
    %222 = vmatprep.subr.mxu0 0.0
    %223 = vmatpush1.msra.mxu0 %v193
    %224 = vmatprep.subr.mxu0 0.0
    %225 = vmatpush1.msra.mxu0 %v192
    %226 = vmatprep.subr.mxu0 0.0
    %227 = vmatpush1.msra.mxu0 %v191
    %228 = vmatprep.subr.mxu0 0.0
    %229 = vmatpush1.msra.mxu0 %v190
    %230 = vmatprep.subr.mxu0 0.0
    %231 = vmatpush1.msra.mxu0 %v189
    %232 = vmatprep.subr.mxu0 0.0
    %233 = vmatpush1.msra.mxu0 %v188
    %234 = vmatprep.subr.mxu0 0.0
    %235 = vmatpush1.msra.mxu0 %v187
    %236 = vmatprep.subr.mxu0 0.0
    %237 = vmatpush1.msra.mxu0 %v186
    %238 = vmatprep.subr.mxu0 0.0
    %239 = vmatpush2.msra.mxu0 0.0
    %240 = vmatprep.subr.mxu0 0.0
    %241 = vmatpush2.msra.mxu0 0.0
    %242 = vmatprep.subr.mxu0 0.0
    %243 = vmatpush2.msra.mxu0 0.0
    %244 = vmatprep.subr.mxu0 0.0
    %245 = vmatpush2.msra.mxu0 0.0
    %246 = vmatprep.subr.mxu0 0.0
    %247 = vmatpush2.msra.mxu0 0.0
    %248 = vmatprep.subr.mxu0 0.0
    %249 = vmatpush2.msra.mxu0 0.0
    %250 = vmatprep.subr.mxu0 0.0
    %251 = vmatpush2.msra.mxu0 0.0
    %252 = vmatprep.subr.mxu0 0.0
    %253 = vmatpush2.msra.mxu0 0.0
    %254 = vmatprep.subr.mxu0 0.0
    %255 = vmatpush2.msra.mxu0 0.0
    %256 = vmatprep.subr.mxu0 0.0
    %257 = vmatpush2.msra.mxu0 0.0
    %258 = vmatprep.subr.mxu0 0.0
    %259 = vmatpush2.msra.mxu0 0.0
    %260 = vmatprep.subr.mxu0 0.0
    %261 = vmatpush2.msra.mxu0 0.0
    %262 = vmatprep.subr.mxu0 0.0
    %263 = vmatpush2.msra.mxu0 0.0
    %264 = vmatprep.subr.mxu0 0.0
    %265 = vmatpush2.msra.mxu0 0.0
    %266 = vmatprep.subr.mxu0 0.0
    %267 = vmatpush2.msra.mxu0 0.0
    %268 = vmatprep.subr.mxu0 0.0
    %269 = vmatpush2.msra.mxu0 0.0
    %270 = vmatprep.mubr.f32.mxu0 0.0
    %271 = vmatmul.mubr.f32.gmra.mxu0 %v183
    %v272 = vpop.f32.mrf.mxu0
    %v273 = vadd.f32 %v205, %v272
    %v274 = vpop.f32.mrf.mxu0
    %275 = vdwg.mxu0
    %v276 = vadd.f32 %v273, %v95
    %277 = vadd.xlane.f32.xlu0 %v276
    %v278 = vpop.xlane.xlu0 %277
    %v279 = vmul.f32 %v278, %v76
    %v280 = vsub.f32 %v276, %v279
    %v281 = vmul.f32 %v280, %v280
    %282 = vadd.xlane.f32.xlu0 %v281
    %v283 = vpop.xlane.xlu0 %282
    %v284 = vmul.f32 %v283, %v76
    %v285 = vadd.f32 %v284, 1e-05
    %v286 = vrsqrt.pop %v285
    %v287 = vmul.f32 %v280, %v286
    %v288 = vlaneseq
    %v289 = vshrl.u32 %v288, 7
    %v290 = vsub.s32 4, %v289
    %v291 = vrot.slane %v73, %v290
    %v292 = vmul.f32 %v287, %v291
    %v293 = vlaneseq
    %v294 = vshrl.u32 %v293, 7
    %v295 = vsub.s32 5, %v294
    %v296 = vrot.slane %v73, %v295
    %v297 = vadd.f32 %v292, %v296
    %298 = vst [vmem:[#allocation10] sm:$0xff] %v297
    %v299 = vlaneseq
    %v300 = vshrl.u32 %v299, 7
    %v301 = vadd.s32 %v300, 8
    %v302 = vadd.s32 %v300, 16
    %v303 = vadd.s32 %v300, 24
    %v304 = vadd.s32 %v300, 32
    %v305 = vadd.s32 %v300, 40
    %v306 = vadd.s32 %v300, 48
    %v307 = vadd.s32 %v300, 56
    %v308 = vadd.s32 %v300, 64
    %v309 = vadd.s32 %v300, 72
    %v310 = vadd.s32 %v300, 80
    %v311 = vadd.s32 %v300, 88
    %v312 = vadd.s32 %v300, 96
    %v313 = vadd.s32 %v300, 104
    %v314 = vadd.s32 %v300, 112
    %v315 = vadd.s32 %v300, 120
    %v316 = vlaneseq
    %v317 = vand.u32 %v316, 127
    %v318 = vmul.u32 %v317, 32
    %vm319 = vcmp.ge.s32.totalorder %v300, %v318
    %vm320 = vcmp.ge.s32.totalorder %v301, %v318
    %vm321 = vcmp.ge.s32.totalorder %v302, %v318
    %vm322 = vcmp.ge.s32.totalorder %v303, %v318
    %vm323 = vcmp.ge.s32.totalorder %v304, %v318
    %vm324 = vcmp.ge.s32.totalorder %v305, %v318
    %vm325 = vcmp.ge.s32.totalorder %v306, %v318
    %vm326 = vcmp.ge.s32.totalorder %v307, %v318
    %vm327 = vcmp.ge.s32.totalorder %v308, %v318
    %vm328 = vcmp.ge.s32.totalorder %v309, %v318
    %vm329 = vcmp.ge.s32.totalorder %v310, %v318
    %vm330 = vcmp.ge.s32.totalorder %v311, %v318
    %vm331 = vcmp.ge.s32.totalorder %v312, %v318
    %vm332 = vcmp.ge.s32.totalorder %v313, %v318
    %vm333 = vcmp.ge.s32.totalorder %v314, %v318
    %vm334 = vcmp.ge.s32.totalorder %v315, %v318
    %v335 = vadd.s32 %v317, 1
    %v336 = vmul.u32 %v335, 32
    %vm337 = vcmp.lt.s32.totalorder %v300, %v336
    %vm338 = vcmp.lt.s32.totalorder %v301, %v336
    %vm339 = vcmp.lt.s32.totalorder %v302, %v336
    %vm340 = vcmp.lt.s32.totalorder %v303, %v336
    %vm341 = vcmp.lt.s32.totalorder %v304, %v336
    %vm342 = vcmp.lt.s32.totalorder %v305, %v336
    %vm343 = vcmp.lt.s32.totalorder %v306, %v336
    %vm344 = vcmp.lt.s32.totalorder %v307, %v336
    %vm345 = vcmp.lt.s32.totalorder %v308, %v336
    %vm346 = vcmp.lt.s32.totalorder %v309, %v336
    %vm347 = vcmp.lt.s32.totalorder %v310, %v336
    %vm348 = vcmp.lt.s32.totalorder %v311, %v336
    %vm349 = vcmp.lt.s32.totalorder %v312, %v336
    %vm350 = vcmp.lt.s32.totalorder %v313, %v336
    %vm351 = vcmp.lt.s32.totalorder %v314, %v336
    %vm352 = vcmp.lt.s32.totalorder %v315, %v336
    %vm353 = vmand %vm319, %vm337
    %vm354 = vmand %vm320, %vm338
    %vm355 = vmand %vm321, %vm339
    %vm356 = vmand %vm322, %vm340
    %vm357 = vmand %vm323, %vm341
    %vm358 = vmand %vm324, %vm342
    %vm359 = vmand %vm325, %vm343
    %vm360 = vmand %vm326, %vm344
    %vm361 = vmand %vm327, %vm345
    %vm362 = vmand %vm328, %vm346
    %vm363 = vmand %vm329, %vm347
    %vm364 = vmand %vm330, %vm348
    %vm365 = vmand %vm331, %vm349
    %vm366 = vmand %vm332, %vm350
    %vm367 = vmand %vm333, %vm351
    %vm368 = vmand %vm334, %vm352
    %v369 = vsel %vm353, 1, 0
    %v370 = vsel %vm354, 1, 0
    %v371 = vsel %vm355, 1, 0
    %v372 = vsel %vm356, 1, 0
    %v373 = vsel %vm357, 1, 0
    %v374 = vsel %vm358, 1, 0
    %v375 = vsel %vm359, 1, 0
    %v376 = vsel %vm360, 1, 0
    %v377 = vsel %vm361, 1, 0
    %v378 = vsel %vm362, 1, 0
    %v379 = vsel %vm363, 1, 0
    %v380 = vsel %vm364, 1, 0
    %v381 = vsel %vm365, 1, 0
    %v382 = vsel %vm366, 1, 0
    %v383 = vsel %vm367, 1, 0
    %v384 = vsel %vm368, 1, 0
    %v385 = vcvt.s32.f32 %v369
    %v386 = vcvt.s32.f32 %v370
    %v387 = vcvt.s32.f32 %v371
    %v388 = vcvt.s32.f32 %v372
    %v389 = vcvt.s32.f32 %v373
    %v390 = vcvt.s32.f32 %v374
    %v391 = vcvt.s32.f32 %v375
    %v392 = vcvt.s32.f32 %v376
    %v393 = vcvt.s32.f32 %v377
    %v394 = vcvt.s32.f32 %v378
    %v395 = vcvt.s32.f32 %v379
    %v396 = vcvt.s32.f32 %v380
    %v397 = vcvt.s32.f32 %v381
    %v398 = vcvt.s32.f32 %v382
    %v399 = vcvt.s32.f32 %v383
    %v400 = vcvt.s32.f32 %v384
    %401 = vmatprep.subr.mxu0 0.0
    %402 = vmatpush1.msra.mxu0 %v400
    %403 = vmatprep.subr.mxu0 0.0
    %404 = vmatpush1.msra.mxu0 %v399
    %405 = vmatprep.subr.mxu0 0.0
    %406 = vmatpush1.msra.mxu0 %v398
    %407 = vmatprep.subr.mxu0 0.0
    %408 = vmatpush1.msra.mxu0 %v397
    %409 = vmatprep.subr.mxu0 0.0
    %410 = vmatpush1.msra.mxu0 %v396
    %411 = vmatprep.subr.mxu0 0.0
    %412 = vmatpush1.msra.mxu0 %v395
    %413 = vmatprep.subr.mxu0 0.0
    %414 = vmatpush1.msra.mxu0 %v394
    %415 = vmatprep.subr.mxu0 0.0
    %416 = vmatpush1.msra.mxu0 %v393
    %417 = vmatprep.subr.mxu0 0.0
    %418 = vmatpush1.msra.mxu0 %v392
    %419 = vmatprep.subr.mxu0 0.0
    %420 = vmatpush1.msra.mxu0 %v391
    %421 = vmatprep.subr.mxu0 0.0
    %422 = vmatpush1.msra.mxu0 %v390
    %423 = vmatprep.subr.mxu0 0.0
    %424 = vmatpush1.msra.mxu0 %v389
    %425 = vmatprep.subr.mxu0 0.0
    %426 = vmatpush1.msra.mxu0 %v388
    %427 = vmatprep.subr.mxu0 0.0
    %428 = vmatpush1.msra.mxu0 %v387
    %429 = vmatprep.subr.mxu0 0.0
    %430 = vmatpush1.msra.mxu0 %v386
    %431 = vmatprep.subr.mxu0 0.0
    %432 = vmatpush1.msra.mxu0 %v385
    %433 = vmatprep.subr.mxu0 0.0
    %434 = vmatpush2.msra.mxu0 0.0
    %435 = vmatprep.subr.mxu0 0.0
    %436 = vmatpush2.msra.mxu0 0.0
    %437 = vmatprep.subr.mxu0 0.0
    %438 = vmatpush2.msra.mxu0 0.0
    %439 = vmatprep.subr.mxu0 0.0
    %440 = vmatpush2.msra.mxu0 0.0
    %441 = vmatprep.subr.mxu0 0.0
    %442 = vmatpush2.msra.mxu0 0.0
    %443 = vmatprep.subr.mxu0 0.0
    %444 = vmatpush2.msra.mxu0 0.0
    %445 = vmatprep.subr.mxu0 0.0
    %446 = vmatpush2.msra.mxu0 0.0
    %447 = vmatprep.subr.mxu0 0.0
    %448 = vmatpush2.msra.mxu0 0.0
    %449 = vmatprep.subr.mxu0 0.0
    %450 = vmatpush2.msra.mxu0 0.0
    %451 = vmatprep.subr.mxu0 0.0
    %452 = vmatpush2.msra.mxu0 0.0
    %453 = vmatprep.subr.mxu0 0.0
    %454 = vmatpush2.msra.mxu0 0.0
    %455 = vmatprep.subr.mxu0 0.0
    %456 = vmatpush2.msra.mxu0 0.0
    %457 = vmatprep.subr.mxu0 0.0
    %458 = vmatpush2.msra.mxu0 0.0
    %459 = vmatprep.subr.mxu0 0.0
    %460 = vmatpush2.msra.mxu0 0.0
    %461 = vmatprep.subr.mxu0 0.0
    %462 = vmatpush2.msra.mxu0 0.0
    %463 = vmatprep.subr.mxu0 0.0
    %464 = vmatpush2.msra.mxu0 0.0
    %465 = vmatprep.mubr.f32.mxu0 0.0
    %466 = vmatmul.mubr.f32.gmra.mxu0 %v297
    %v467 = vpop.f32.mrf.mxu0
    %v468 = vadd.f32 0.0, %v467
    %v469 = vpop.f32.mrf.mxu0
    %470 = vdwg.mxu0
    %vm471 = vcmask 31744
    %v472 = vsel %vm471, %v468, inf
    %473 = vmin.xlane.f32.xlu0 %v472
    %v474 = vpop.xlane.xlu0 %473
    %v475 = vsub.f32 %v468, %v474
    %v476 = vadd.f32 %v475, 1e-08
    %v477 = vsel %vm471, %v476, 0.0
    %478 = vadd.xlane.f32.xlu0 %v477
    %v479 = vpop.xlane.xlu0 %478
    %v480 = vrcp.pop %v479
    %v481 = vmul.f32 %v476, %v480
    %482 = vst.msk [vmem:[%s5] sm:$0xff] %vm471, %v481
    // Predicated region
    $region34: #{tpu_custom_call.1} parent=1 // pred_check
      _
    $region35: #{tpu_custom_call.1} parent=1 // pred_check_branch
      %484 = sbr.rel (0) target = $region37
    $region36: #{tpu_custom_call.1} parent=1 // pred_region
      %s486 = ssub.s32 128, 128
      %487 = vsyncadd [#allocation4], %s486
      %s489 = sshll.u32 [#allocation10], 4
      %s490 = int_to_ptr.vmem [resolvable:$true] %s489
      %492 = dma.vmem_to_hbm [thread:$0]  %s490, 128, %s4, [#allocation4]
    $region37: #{tpu_custom_call.1} parent=1 // pred_fallthru
      _
    // Predicated region
    $region38: #{tpu_custom_call.1} parent=1 // pred_check
      _
    $region39: #{tpu_custom_call.1} parent=1 // pred_check_branch
      %494 = sbr.rel (0) target = $region41
    $region40: #{tpu_custom_call.1} parent=1 // pred_region
      _
    $region41: #{tpu_custom_call.1} parent=1 // pred_fallthru
      _
    // Predicated region
    $region42: #{tpu_custom_call.1} parent=1 // pred_check
      _
    $region43: #{tpu_custom_call.1} parent=1 // pred_check_branch
      %496 = sbr.rel (0) target = $region45
    $region44: #{tpu_custom_call.1} parent=1 // pred_region
      %497 = dma.done [#allocation4], 128
    $region45: #{tpu_custom_call.1} parent=1 // pred_fallthru
      _
    // Predicated region
    $region46: #{tpu_custom_call.1} parent=1 // pred_check
      _
    $region47: #{tpu_custom_call.1} parent=1 // pred_check_branch
      %499 = sbr.rel (0) target = $region49
    $region48: #{tpu_custom_call.1} parent=1 // pred_region
      _
    $region49: #{tpu_custom_call.1} parent=1 // pred_fallthru
      _
    %500 = vsyncpa [#allocation3], 1
    %501 = vsyncpa [#allocation6], 1
    %502 = vsyncpa [#allocation9], 1
    %503 = vsyncpa [#allocation4], 1

</llo_original>
